<compile_context>
chip_gen: v7x
topology: tpu7x:2x2x1
jax: 0.10.0
libtpu: 0.0.40
codegen_flags: <defaults>
</compile_context>

<pallas_src>
import functools

import jax
import jax.numpy as jnp
from jax.experimental import pallas as pl
from jax.experimental.pallas import tpu as pltpu


def _poly_cutoff_kernel(x_ref, o_ref, *, r_max: float, p: int):
    """envelope(x) = 1 - (p+1)(p+2)/2 u^p + p(p+2) u^(p+1) - p(p+1)/2 u^(p+2),
    u = x / r_max, multiplied by (x < r_max)."""
    x = x_ref[...].astype(jnp.float32)
    u = x * (1.0 / r_max)

    # Integer powers via repeated multiply (p is a static Python int) -- stays
    # entirely on the VPU, no transcendental pow.
    up = u
    for _ in range(p - 1):
        up = up * u          # u^p
    up1 = up * u             # u^(p+1)
    up2 = up1 * u            # u^(p+2)

    pf = float(p)
    c1 = (pf + 1.0) * (pf + 2.0) / 2.0
    c2 = pf * (pf + 2.0)
    c3 = pf * (pf + 1.0) / 2.0

    env = 1.0 - c1 * up + c2 * up1 - c3 * up2
    env = jnp.where(x < r_max, env, 0.0)
    o_ref[...] = env.astype(o_ref.dtype)


def _round_up(a: int, m: int) -> int:
    return ((a + m - 1) // m) * m


def polynomial_cutoff(x, *, r_max: float, p: int = 6,
                      lanes: int = 128, max_tile_rows: int = 1024):
    """Elementwise polynomial cutoff via one Pallas TPU kernel.

    Works on any input shape/dtype: the array is flattened, zero-padded to a
    lane-dense (rows, 128) layout, processed tile-by-tile, then sliced back.
    """
    orig_shape = x.shape
    orig_dtype = x.dtype
    flat = x.reshape(-1)
    n = flat.shape[0]

    # Sublane packing multiple depends on element width (f32:8, bf16:16, i8:32).
    itemsize = jnp.dtype(orig_dtype).itemsize
    sub_mult = {4: 8, 2: 16, 1: 32}.get(itemsize, 8)

    rows = pl.cdiv(n, lanes)
    # Large tile for amortization; for small inputs just one (padded) tile.
    # Rows are a multiple of sub_mult; big inputs naturally give grid >= 2
    # steps, which lets ("parallel",) shard across the two v7x TensorCores.
    tile_rows = min(_round_up(max_tile_rows, sub_mult),
                    _round_up(max(rows, 1), sub_mult))
    padded_rows = _round_up(max(rows, 1), tile_rows)
    padded_n = padded_rows * lanes

    if padded_n != n:
        flat = jnp.pad(flat, (0, padded_n - n))
    x2 = flat.reshape(padded_rows, lanes)

    grid = (padded_rows // tile_rows,)
    kernel = functools.partial(_poly_cutoff_kernel, r_max=float(r_max), p=int(p))

    out = pl.pallas_call(
        kernel,
        out_shape=jax.ShapeDtypeStruct((padded_rows, lanes), orig_dtype),
        grid_spec=pltpu.PrefetchScalarGridSpec(
            num_scalar_prefetch=0,
            grid=grid,
            in_specs=[pl.BlockSpec((tile_rows, lanes), lambda i: (i, 0))],
            out_specs=pl.BlockSpec((tile_rows, lanes), lambda i: (i, 0)),
        ),
        compiler_params=pltpu.CompilerParams(
            dimension_semantics=("parallel",)),
    )(x2)

    return out.reshape(-1)[:n].reshape(orig_shape)


def _reference_forward(x, r_max: float, p: int):
    """Pure-JAX reference matching the torch module exactly."""
    pf = jnp.float32(p)
    u = x / r_max
    env = (1.0
           - (pf + 1.0) * (pf + 2.0) / 2.0 * jnp.power(u, pf)
           + pf * (pf + 2.0) * jnp.power(u, pf + 1.0)
           - pf * (pf + 1.0) / 2.0 * jnp.power(u, pf + 2.0))
    return env * (x < r_max).astype(x.dtype)


if __name__ == "__main__":
    # Small shapes consistent with the module: x is a batch of edge distances
    # (n_edges, 1); values span both sides of r_max to exercise the cutoff.
    r_max = 5.0
    p = 6
    n_edges = 300  # deliberately NOT a multiple of the tile -> exercises padding

    key = jax.random.PRNGKey(0)
    x = jax.random.uniform(key, (n_edges, 1), jnp.float32,
                           minval=0.0, maxval=1.5 * r_max)

    out = polynomial_cutoff(x, r_max=r_max, p=p)
    out = jax.block_until_ready(out)

    ref = _reference_forward(x, r_max, p)
    assert out.shape == x.shape
    assert jnp.allclose(out, ref, atol=1e-5, rtol=1e-5), "mismatch vs reference"

    print("KERNEL_OK")
</pallas_src>

<mosaic_0001>
module attributes {stable_mosaic.version = 11 : i64} {
  func.func @_poly_cutoff_kernel(%arg0: i32, %arg1: memref<8x128xf32, #tpu.memory_space<vmem>>, %arg2: memref<8x128xf32, #tpu.memory_space<vmem>>) attributes {dimension_semantics = [#tpu.dimension_semantics<parallel>], iteration_bounds = array<i64: 1>, scalar_prefetch = 0 : i64, scratch_operands = 0 : i64, tpu.core_type = #tpu.core_type<tc>, window_params = [{transform_indices = @transform_0, window_bounds = array<i64: 8, 128>}, {transform_indices = @transform_1, window_bounds = array<i64: 8, 128>}]} {
    %c0 = arith.constant 0 : index
    %c0_0 = arith.constant 0 : index
    %0 = vector.load %arg1[%c0, %c0_0] : memref<8x128xf32, #tpu.memory_space<vmem>>, vector<8x128xf32>
    %cst = arith.constant 2.000000e-01 : f32
    %1 = vector.broadcast %cst : f32 to vector<8x128xf32>
    %2 = arith.mulf %0, %1 : vector<8x128xf32>
    %3 = arith.mulf %2, %2 : vector<8x128xf32>
    %4 = arith.mulf %3, %2 : vector<8x128xf32>
    %5 = arith.mulf %4, %2 : vector<8x128xf32>
    %6 = arith.mulf %5, %2 : vector<8x128xf32>
    %7 = arith.mulf %6, %2 : vector<8x128xf32>
    %8 = arith.mulf %7, %2 : vector<8x128xf32>
    %9 = arith.mulf %8, %2 : vector<8x128xf32>
    %cst_1 = arith.constant 2.800000e+01 : f32
    %10 = vector.broadcast %cst_1 : f32 to vector<8x128xf32>
    %11 = arith.mulf %10, %7 : vector<8x128xf32>
    %cst_2 = arith.constant 1.000000e+00 : f32
    %12 = vector.broadcast %cst_2 : f32 to vector<8x128xf32>
    %13 = arith.subf %12, %11 : vector<8x128xf32>
    %cst_3 = arith.constant 4.800000e+01 : f32
    %14 = vector.broadcast %cst_3 : f32 to vector<8x128xf32>
    %15 = arith.mulf %14, %8 : vector<8x128xf32>
    %16 = arith.addf %13, %15 : vector<8x128xf32>
    %cst_4 = arith.constant 2.100000e+01 : f32
    %17 = vector.broadcast %cst_4 : f32 to vector<8x128xf32>
    %18 = arith.mulf %17, %9 : vector<8x128xf32>
    %19 = arith.subf %16, %18 : vector<8x128xf32>
    %cst_5 = arith.constant 5.000000e+00 : f32
    %20 = vector.broadcast %cst_5 : f32 to vector<8x128xf32>
    %21 = arith.cmpf olt, %0, %20 : vector<8x128xf32>
    %cst_6 = arith.constant 0.000000e+00 : f32
    %22 = vector.broadcast %cst_6 : f32 to vector<8x128xf32>
    %23 = arith.select %21, %19, %22 : vector<8x128xi1>, vector<8x128xf32>
    %c0_7 = arith.constant 0 : index
    %c0_8 = arith.constant 0 : index
    %24 = vector.load %arg2[%c0_7, %c0_8] : memref<8x128xf32, #tpu.memory_space<vmem>>, vector<8x128xf32>
    tpu.vector_store %arg2[%c0_7, %c0_8], %23 {strides = array<i32>} : memref<8x128xf32, #tpu.memory_space<vmem>>, vector<8x128xf32>,
    return
  }
  func.func @transform_0(%arg0: i32) -> (i32, i32) {
    %c0_i32 = arith.constant 0 : i32
    %c0_i32_0 = arith.constant 0 : i32
    return %arg0, %c0_i32 : i32, i32
  }
  func.func @transform_1(%arg0: i32) -> (i32, i32) {
    %c0_i32 = arith.constant 0 : i32
    %c0_i32_0 = arith.constant 0 : i32
    return %arg0, %c0_i32 : i32, i32
  }
}

</mosaic_0001>

<llo_original>
// kernel: tpu_custom_call.1
$region0: #{tpu_custom_call.1}
  #allocation0 [shape = 'u32[]', space=smem, size = 0x4, offset = 0x4, fixed_abs, tag = 'smem constant byte address 0x4 - core index']
  #allocation1 [shape = 'u32[144,128]{1,0:T(1,128)}', space=vmem, size = 0x12000, scoped, tag = 'internal scratch']
  %s0 = inlined_call_operand.hbm [shape: f32[8,128], index: 0, kind: input, shape index: {}]
  %s1 = inlined_call_operand.hbm [shape: f32[8,128], index: 1, kind: output, shape index: {}]
  %s2 = sld [smem:[#allocation0]]
  $region18: #{tpu_custom_call.1} parent=0
    _
  %s4 = ssub.s32 1, %s2
  %s5 = scalar_select 0, %s4, %s2
  $region1: #{tpu_custom_call.1} parent=0
    #allocation2 [shape = 'u8[4096]{0}', space=vmem, size = 0x1000, scoped, tag = 'input window, operand 0, single buffered']
    #allocation3 [shape = 's32[1]{0}', space=sflag, size = 0x4, scoped, tag = 'scoped memory for tpu_custom_call.1']
    #allocation4 [shape = 's32[1]{0}', space=sflag, size = 0x4, scoped, tag = 'scoped memory for tpu_custom_call.1']
    #allocation5 [shape = 'u8[4096]{0}', space=vmem, size = 0x1000, scoped, tag = 'output window, operand 0, single buffered']
    %6 = vsyncpa [#allocation3], 0
    %7 = vsyncpa [#allocation4], 0
    // Predicated region
    $region2: #{tpu_custom_call.1} parent=1 // pred_check
      _
    $region3: #{tpu_custom_call.1} parent=1 // pred_check_branch
      %9 = sbr.rel (0) target = $region5
    $region4: #{tpu_custom_call.1} parent=1 // pred_region
      %s11 = ssub.s32 128, 128
      %12 = vsyncadd [#allocation3], %s11
      %s14 = sshll.u32 [#allocation2], 4
      %s15 = int_to_ptr.vmem [resolvable:$true] %s14
      %17 = dma.hbm_to_vmem [thread:$0]  %s0, 128, %s15, [#allocation3]
    $region5: #{tpu_custom_call.1} parent=1 // pred_fallthru
      _
    // Predicated region
    $region6: #{tpu_custom_call.1} parent=1 // pred_check
      _
    $region7: #{tpu_custom_call.1} parent=1 // pred_check_branch
      %19 = sbr.rel (0) target = $region9
    $region8: #{tpu_custom_call.1} parent=1 // pred_region
      %20 = dma.done [#allocation3], 128
    $region9: #{tpu_custom_call.1} parent=1 // pred_fallthru
      _
    %v21 = vld [vmem:[#allocation2] sm:$0xff]
    %v22 = vmul.f32 %v21, 0.2
    %v23 = vmul.f32 %v22, %v22
    %v24 = vmul.f32 %v23, %v22
    %v25 = vmul.f32 %v24, %v22
    %v26 = vmul.f32 %v25, %v22
    %v27 = vmul.f32 %v26, %v22
    %v28 = vmul.f32 %v27, %v22
    %v29 = vmul.f32 %v28, %v22
    %v30 = vmul.f32 %v27, 28.0
    %v31 = vsub.f32 1.0, %v30
    %v32 = vmul.f32 %v28, 48.0
    %v33 = vadd.f32 %v31, %v32
    %v34 = vmul.f32 %v29, 21.0
    %v35 = vsub.f32 %v33, %v34
    %vm36 = vcmp.lt.f32.partialorder %v21, 5.0
    %v37 = vsel %vm36, %v35, 0.0
    %38 = vst [vmem:[#allocation5] sm:$0xff] %v37
    // Predicated region
    $region10: #{tpu_custom_call.1} parent=1 // pred_check
      _
    $region11: #{tpu_custom_call.1} parent=1 // pred_check_branch
      %40 = sbr.rel (0) target = $region13
    $region12: #{tpu_custom_call.1} parent=1 // pred_region
      %s42 = ssub.s32 128, 128
      %43 = vsyncadd [#allocation4], %s42
      %s45 = sshll.u32 [#allocation5], 4
      %s46 = int_to_ptr.vmem [resolvable:$true] %s45
      %48 = dma.vmem_to_hbm [thread:$0]  %s46, 128, %s1, [#allocation4]
    $region13: #{tpu_custom_call.1} parent=1 // pred_fallthru
      _
    // Predicated region
    $region14: #{tpu_custom_call.1} parent=1 // pred_check
      _
    $region15: #{tpu_custom_call.1} parent=1 // pred_check_branch
      %50 = sbr.rel (0) target = $region17
    $region16: #{tpu_custom_call.1} parent=1 // pred_region
      %51 = dma.done [#allocation4], 128
    $region17: #{tpu_custom_call.1} parent=1 // pred_fallthru
      _
    %52 = vsyncpa [#allocation3], 1
    %53 = vsyncpa [#allocation4], 1

</llo_original>
